<compile_context>
chip_gen: v7x
topology: tpu7x:2x2x1
jax: 0.10.0
libtpu: 0.0.40
codegen_flags: <defaults>
</compile_context>

<pallas_src>
import functools
import numpy as np

import jax
import jax.numpy as jnp
from jax import lax
from jax.experimental import pallas as pl
from jax.experimental.pallas import tpu as pltpu


_EPS = 1e-12                       # F.normalize default eps
_VMEM_LIMIT = 32 * 1024 * 1024     # explicit scoped-VMEM budget; safe on v5e/v6e/v7x


def _bilinear_matrix(out_size: int, in_size: int) -> np.ndarray:
    """Interpolation matrix reproducing F.interpolate(mode='bilinear', align_corners=False)."""
    scale = in_size / out_size
    p = np.arange(out_size, dtype=np.float64)
    src = (p + 0.5) * scale - 0.5
    src = np.clip(src, 0.0, None)
    i0 = np.clip(np.floor(src).astype(np.int64), 0, in_size - 1)
    i1 = np.minimum(i0 + 1, in_size - 1)
    frac = src - i0
    m = np.zeros((out_size, in_size), dtype=np.float32)
    m[np.arange(out_size), i0] += (1.0 - frac).astype(np.float32)
    m[np.arange(out_size), i1] += frac.astype(np.float32)
    return m


def _pick_pixel_tile(m: int, max_tile: int = 2048) -> int:
    """Largest pixel tile that divides m and is a multiple of 128 (or all of m)."""
    if m <= max_tile:
        return m
    start = max_tile - (max_tile % 128)
    for t in range(start, 0, -128):
        if m % t == 0:
            return t
    return m


# ------------------------------------------------------------------------------
# Kernel 1: per batch element, build the one-hot target and resize it to the
# feature resolution with SEPARABLE bilinear interpolation:
#     out[0, c] = Rh @ onehot_c @ Rw^T            (Hf, Wf)
# The class loop is a static Python unroll (C = n_new_classes is small); channels
# whose class id is 0 (background) or ignore_index stay zero — identical to the
# PyTorch `for cls_idx in label.unique()` loop (absent classes give an all-zero
# one-hot, hence an all-zero channel, in both implementations).
# ------------------------------------------------------------------------------
def _target_interp_kernel(label_ref, rh_ref, rwT_ref, out_ref, *,
                          n_old, ignore_index, n_cls):
    lab = label_ref[0]                                     # (H, W) int32
    rh = rh_ref[...]                                       # (Hf, H)
    rwT = rwT_ref[...]                                     # (W, Wf)
    zeros_hw = jnp.zeros(out_ref.shape[2:], jnp.float32)   # (Hf, Wf)
    for c in range(n_cls):                                 # static unroll
        cls_id = c + n_old
        if cls_id == 0 or cls_id == ignore_index:
            out_ref[0, c] = zeros_hw
        else:
            onehot = (lab == cls_id).astype(jnp.float32)                        # (H, W)
            tmp = jnp.dot(rh, onehot, preferred_element_type=jnp.float32)       # (Hf, W)
            out_ref[0, c] = jnp.dot(tmp, rwT, preferred_element_type=jnp.float32)


# ------------------------------------------------------------------------------
# Kernel 2: fused hot path, channel-major / lane-dense.
#   - per-pixel L2 normalization of features (F.normalize(dim=1)) via rsqrt (EUP)
#   - class-center accumulation  acc[c, d] += sum_m t[c, m] * fn[d, m]
#     (MXU contraction over the pixel/lane axis, K = pixel tile)
#   - last grid step: normalize centers, pairwise L2 distances to previous
#     prototypes, final mean(1 / min_p dist) loss.
# ------------------------------------------------------------------------------
def _center_loss_kernel(f_ref, t_ref, proto_ref, loss_ref, acc_ref, *, eps):
    n = pl.program_id(0)
    j = pl.program_id(1)

    @pl.when((n == 0) & (j == 0))
    def _():
        acc_ref[...] = jnp.zeros_like(acc_ref)

    f = f_ref[0].astype(jnp.float32)                       # (D, TM) channel-major
    t = t_ref[0]                                           # (C, TM)

    # F.normalize(features, dim=1): rsqrt(max(|f|^2, eps^2)) == 1 / max(|f|, eps)
    ssq = jnp.sum(f * f, axis=0, keepdims=True)            # (1, TM)
    fn = f * lax.rsqrt(jnp.maximum(ssq, eps * eps))        # (D, TM)

    # (C, D) += t @ fn^T  (contract over the pixel/lane axis)
    acc_ref[...] += lax.dot_general(
        t, fn, dimension_numbers=(((1,), (1,)), ((), ())),
        preferred_element_type=jnp.float32)

    @pl.when((n == pl.num_programs(0) - 1) & (j == pl.num_programs(1) - 1))
    def _():
        nc = acc_ref[...]                                            # (C, D)
        csq = jnp.sum(nc * nc, axis=-1, keepdims=True)               # (C, 1)
        ncn = nc * lax.rsqrt(jnp.maximum(csq, eps * eps))            # normalized centers

        proto = proto_ref[...].astype(jnp.float32)                   # (P, D)
        cross = lax.dot_general(
            ncn, proto, dimension_numbers=(((1,), (1,)), ((), ())),
            preferred_element_type=jnp.float32)                      # (C, P)
        ncn_sq = jnp.sum(ncn * ncn, axis=-1, keepdims=True)          # (C, 1)
        ones_row = jnp.ones((1, proto.shape[1]), jnp.float32)
        proto_sq_row = lax.dot_general(
            ones_row, proto * proto,
            dimension_numbers=(((1,), (1,)), ((), ())),
            preferred_element_type=jnp.float32)                      # (1, P)

        d2 = ncn_sq + proto_sq_row - 2.0 * cross                     # (C, P)
        dist = jnp.sqrt(jnp.maximum(d2, 0.0))
        dmin = jnp.min(dist, axis=1, keepdims=True)                  # (C, 1)
        # No clamp on dmin: same semantics as the PyTorch module.
        loss_ref[...] = jnp.mean(1.0 / dmin, axis=0, keepdims=True)  # (1, 1)


# ------------------------------------------------------------------------------
# Wrapper: glue only (free reshapes, interpolation factors, pallas_call plumbing)
# ------------------------------------------------------------------------------
def cont_loss(features, logit, label, prev_prototypes,
              ignore_index=255, n_old_classes=0, *, max_tile_pixels=2048):
    N, D, Hf, Wf = features.shape
    _, C, H, W = logit.shape
    assert label.shape == (N, H, W)
    P = prev_prototypes.shape[0]
    hfwf = Hf * Wf

    # Separable bilinear-resize factors — a few KiB each, instead of the
    # (H*W x Hf*Wf) kron matrix of the previous version.
    rh = jnp.asarray(_bilinear_matrix(Hf, H))       # (Hf, H)
    rwT = jnp.asarray(_bilinear_matrix(Wf, W).T)    # (W, Wf)

    small_target = pl.pallas_call(
        functools.partial(_target_interp_kernel, n_old=n_old_classes,
                          ignore_index=ignore_index, n_cls=C),
        out_shape=jax.ShapeDtypeStruct((N, C, Hf, Wf), jnp.float32),
        grid=(N,),
        in_specs=[pl.BlockSpec((1, H, W), lambda n: (n, 0, 0)),
                  pl.BlockSpec((Hf, H), lambda n: (0, 0)),
                  pl.BlockSpec((W, Wf), lambda n: (0, 0))],
        out_specs=pl.BlockSpec((1, C, Hf, Wf), lambda n: (n, 0, 0, 0)),
        compiler_params=pltpu.CompilerParams(
            dimension_semantics=("parallel",),          # independent per batch elem
            vmem_limit_bytes=_VMEM_LIMIT),
    )(label.astype(jnp.int32), rh, rwT)

    # Channel-major, lane-dense views: pure reshapes, no transposes, no extra
    # HBM round-trip over the (large) features tensor.
    f_cm = features.reshape(N, D, hfwf)             # (N, D, Hf*Wf)
    t_cm = small_target.reshape(N, C, hfwf)         # (N, C, Hf*Wf)

    tm = _pick_pixel_tile(hfwf, max_tile_pixels)
    n_tiles = hfwf // tm

    # NOTE: on v7x (2 TensorCores) the pixel reduction could additionally be
    # split into per-core partial accumulators combined in a tiny epilogue;
    # NOTE: for bandwidth-bound production shapes, cast features/target to
    # bfloat16 at the wrapper (accumulation stays f32) for ~2x HBM savings.
    loss = pl.pallas_call(
        functools.partial(_center_loss_kernel, eps=_EPS),
        out_shape=jax.ShapeDtypeStruct((1, 1), jnp.float32),
        grid=(N, n_tiles),
        in_specs=[pl.BlockSpec((1, D, tm), lambda n, j: (n, 0, j)),
                  pl.BlockSpec((1, C, tm), lambda n, j: (n, 0, j)),
                  pl.BlockSpec((P, D), lambda n, j: (0, 0))],
        out_specs=pl.BlockSpec((1, 1), lambda n, j: (0, 0)),
        scratch_shapes=[pltpu.VMEM((C, D), jnp.float32)],
        compiler_params=pltpu.CompilerParams(
            dimension_semantics=("arbitrary", "arbitrary"),  # carried accumulator
            vmem_limit_bytes=_VMEM_LIMIT),
    )(f_cm, t_cm, prev_prototypes.astype(jnp.float32))

    return loss[0, 0]


# ------------------------------------------------------------------------------
# Pure-JAX reference (same math; used only to sanity-check the kernels)
# ------------------------------------------------------------------------------
def cont_loss_ref(features, logit, label, prev_prototypes,
                  ignore_index=255, n_old_classes=0):
    N, D, Hf, Wf = features.shape
    _, C, H, W = logit.shape
    cls_ids = jnp.arange(C, dtype=jnp.int32) + n_old_classes
    valid = (cls_ids != 0) & (cls_ids != ignore_index)
    target = (label[:, None] == cls_ids[None, :, None, None]).astype(jnp.float32)
    target = target * valid[None, :, None, None].astype(jnp.float32)
    rh = jnp.asarray(_bilinear_matrix(Hf, H))
    rw = jnp.asarray(_bilinear_matrix(Wf, W))
    small = jnp.einsum('nchw,ph,qw->ncpq', target, rh, rw)
    fn = features / jnp.maximum(jnp.linalg.norm(features, axis=1, keepdims=True), 1e-12)
    nc = jnp.einsum('ndhw,nchw->cd', fn, small)
    nc = nc / jnp.maximum(jnp.linalg.norm(nc, axis=1, keepdims=True), 1e-12)
    dist = jnp.linalg.norm(nc[None, :, :] - prev_prototypes[:, None, :], axis=2)
    return jnp.mean(1.0 / jnp.min(dist, axis=0))


if __name__ == "__main__":
    keys = jax.random.split(jax.random.PRNGKey(0), 5)

    N, C, H, W = 2, 5, 16, 16          # logit / label resolution, C = n_new_classes
    D, Hf, Wf = 32, 8, 8               # feature channels / resolution
    P = 6                              # number of previous prototypes
    n_old_classes = 0
    ignore_index = 255

    features = jax.random.normal(keys[0], (N, D, Hf, Wf), jnp.float32)
    logit = jax.random.normal(keys[1], (N, C, H, W), jnp.float32)
    label = jax.random.randint(keys[2], (N, H, W), 0, C).astype(jnp.int32)
    ign = jax.random.uniform(keys[3], (N, H, W)) < 0.1
    label = jnp.where(ign, ignore_index, label)
    prev_prototypes = jax.random.normal(keys[4], (P, D), jnp.float32)
    prev_prototypes = prev_prototypes / jnp.linalg.norm(prev_prototypes, axis=1, keepdims=True)

    loss = cont_loss(features, logit, label, prev_prototypes,
                     ignore_index=ignore_index, n_old_classes=n_old_classes)
    loss = jax.block_until_ready(loss)

    ref = cont_loss_ref(features, logit, label, prev_prototypes,
                        ignore_index=ignore_index, n_old_classes=n_old_classes)
    assert jnp.allclose(loss, ref, rtol=1e-3, atol=1e-4), (float(loss), float(ref))

    print("KERNEL_OK")
</pallas_src>

<mosaic_0001>
module attributes {stable_mosaic.version = 11 : i64} {
  func.func @_target_interp_kernel(%arg0: i32, %arg1: memref<1x16x16xi32, #tpu.memory_space<vmem>>, %arg2: memref<8x16xf32, #tpu.memory_space<vmem>>, %arg3: memref<16x8xf32, #tpu.memory_space<vmem>>, %arg4: memref<1x5x8x8xf32, #tpu.memory_space<vmem>>) attributes {dimension_semantics = [#tpu.dimension_semantics<parallel>], iteration_bounds = array<i64: 2>, scalar_prefetch = 0 : i64, scratch_operands = 0 : i64, tpu.core_type = #tpu.core_type<tc>, window_params = [{transform_indices = @transform_0, window_bounds = array<i64: 1, 16, 16>}, {pipeline_mode = #tpu.pipeline_mode<synchronous>, transform_indices = @transform_1, window_bounds = array<i64: 8, 16>}, {pipeline_mode = #tpu.pipeline_mode<synchronous>, transform_indices = @transform_2, window_bounds = array<i64: 16, 8>}, {transform_indices = @transform_3, window_bounds = array<i64: 1, 5, 8, 8>}]} {
    %c0 = arith.constant 0 : index
    %c0_0 = arith.constant 0 : index
    %c0_1 = arith.constant 0 : index
    %0 = vector.load %arg1[%c0, %c0_0, %c0_1] : memref<1x16x16xi32, #tpu.memory_space<vmem>>, vector<1x16x16xi32>
    %1 = vector.shape_cast %0 : vector<1x16x16xi32> to vector<16x16xi32>
    %c0_2 = arith.constant 0 : index
    %c0_3 = arith.constant 0 : index
    %2 = vector.load %arg2[%c0_2, %c0_3] : memref<8x16xf32, #tpu.memory_space<vmem>>, vector<8x16xf32>
    %c0_4 = arith.constant 0 : index
    %c0_5 = arith.constant 0 : index
    %3 = vector.load %arg3[%c0_4, %c0_5] : memref<16x8xf32, #tpu.memory_space<vmem>>, vector<16x8xf32>
    %cst = arith.constant 0.000000e+00 : f32
    %4 = vector.broadcast %cst : f32 to vector<8x8xf32>
    %c0_6 = arith.constant 0 : index
    %c0_7 = arith.constant 0 : index
    %c0_8 = arith.constant 0 : index
    %c0_9 = arith.constant 0 : index
    %5 = vector.load %arg4[%c0_6, %c0_7, %c0_8, %c0_9] : memref<1x5x8x8xf32, #tpu.memory_space<vmem>>, vector<1x1x8x8xf32>
    %6 = vector.shape_cast %5 : vector<1x1x8x8xf32> to vector<8x8xf32>
    %7 = vector.shape_cast %4 : vector<8x8xf32> to vector<1x1x8x8xf32>
    tpu.vector_store %arg4[%c0_6, %c0_7, %c0_8, %c0_9], %7 {strides = array<i32>} : memref<1x5x8x8xf32, #tpu.memory_space<vmem>>, vector<1x1x8x8xf32>,
    %c1_i32 = arith.constant 1 : i32
    %8 = vector.broadcast %c1_i32 : i32 to vector<16x16xi32>
    %9 = arith.cmpi eq, %1, %8 : vector<16x16xi32>
    %10 = arith.extui %9 : vector<16x16xi1> to vector<16x16xi32>
    %11 = arith.sitofp %10 : vector<16x16xi32> to vector<16x16xf32>
    %cst_10 = arith.constant dense<0.000000e+00> : vector<8x16xf32>
    %12 = tpu.matmul %2, %11, %cst_10 {dimension_numbers = #tpu.dot_dimension_numbers<[1], [0], [0], [1], [0, 0, 1, 1], [], []>} : vector<8x16xf32>, vector<16x16xf32>, vector<8x16xf32> -> vector<8x16xf32>
    %cst_11 = arith.constant dense<0.000000e+00> : vector<8x8xf32>
    %13 = tpu.matmul %12, %3, %cst_11 {dimension_numbers = #tpu.dot_dimension_numbers<[1], [0], [0], [1], [0, 0, 1, 1], [], []>} : vector<8x16xf32>, vector<16x8xf32>, vector<8x8xf32> -> vector<8x8xf32>
    %c0_12 = arith.constant 0 : index
    %c1 = arith.constant 1 : index
    %c0_13 = arith.constant 0 : index
    %c0_14 = arith.constant 0 : index
    %14 = vector.load %arg4[%c0_12, %c1, %c0_13, %c0_14] : memref<1x5x8x8xf32, #tpu.memory_space<vmem>>, vector<1x1x8x8xf32>
    %15 = vector.shape_cast %14 : vector<1x1x8x8xf32> to vector<8x8xf32>
    %16 = vector.shape_cast %13 : vector<8x8xf32> to vector<1x1x8x8xf32>
    tpu.vector_store %arg4[%c0_12, %c1, %c0_13, %c0_14], %16 {strides = array<i32>} : memref<1x5x8x8xf32, #tpu.memory_space<vmem>>, vector<1x1x8x8xf32>,
    %c2_i32 = arith.constant 2 : i32
    %17 = vector.broadcast %c2_i32 : i32 to vector<16x16xi32>
    %18 = arith.cmpi eq, %1, %17 : vector<16x16xi32>
    %19 = arith.extui %18 : vector<16x16xi1> to vector<16x16xi32>
    %20 = arith.sitofp %19 : vector<16x16xi32> to vector<16x16xf32>
    %cst_15 = arith.constant dense<0.000000e+00> : vector<8x16xf32>
    %21 = tpu.matmul %2, %20, %cst_15 {dimension_numbers = #tpu.dot_dimension_numbers<[1], [0], [0], [1], [0, 0, 1, 1], [], []>} : vector<8x16xf32>, vector<16x16xf32>, vector<8x16xf32> -> vector<8x16xf32>
    %cst_16 = arith.constant dense<0.000000e+00> : vector<8x8xf32>
    %22 = tpu.matmul %21, %3, %cst_16 {dimension_numbers = #tpu.dot_dimension_numbers<[1], [0], [0], [1], [0, 0, 1, 1], [], []>} : vector<8x16xf32>, vector<16x8xf32>, vector<8x8xf32> -> vector<8x8xf32>
    %c0_17 = arith.constant 0 : index
    %c2 = arith.constant 2 : index
    %c0_18 = arith.constant 0 : index
    %c0_19 = arith.constant 0 : index
    %23 = vector.load %arg4[%c0_17, %c2, %c0_18, %c0_19] : memref<1x5x8x8xf32, #tpu.memory_space<vmem>>, vector<1x1x8x8xf32>
    %24 = vector.shape_cast %23 : vector<1x1x8x8xf32> to vector<8x8xf32>
    %25 = vector.shape_cast %22 : vector<8x8xf32> to vector<1x1x8x8xf32>
    tpu.vector_store %arg4[%c0_17, %c2, %c0_18, %c0_19], %25 {strides = array<i32>} : memref<1x5x8x8xf32, #tpu.memory_space<vmem>>, vector<1x1x8x8xf32>,
    %c3_i32 = arith.constant 3 : i32
    %26 = vector.broadcast %c3_i32 : i32 to vector<16x16xi32>
    %27 = arith.cmpi eq, %1, %26 : vector<16x16xi32>
    %28 = arith.extui %27 : vector<16x16xi1> to vector<16x16xi32>
    %29 = arith.sitofp %28 : vector<16x16xi32> to vector<16x16xf32>
    %cst_20 = arith.constant dense<0.000000e+00> : vector<8x16xf32>
    %30 = tpu.matmul %2, %29, %cst_20 {dimension_numbers = #tpu.dot_dimension_numbers<[1], [0], [0], [1], [0, 0, 1, 1], [], []>} : vector<8x16xf32>, vector<16x16xf32>, vector<8x16xf32> -> vector<8x16xf32>
    %cst_21 = arith.constant dense<0.000000e+00> : vector<8x8xf32>
    %31 = tpu.matmul %30, %3, %cst_21 {dimension_numbers = #tpu.dot_dimension_numbers<[1], [0], [0], [1], [0, 0, 1, 1], [], []>} : vector<8x16xf32>, vector<16x8xf32>, vector<8x8xf32> -> vector<8x8xf32>
    %c0_22 = arith.constant 0 : index
    %c3 = arith.constant 3 : index
    %c0_23 = arith.constant 0 : index
    %c0_24 = arith.constant 0 : index
    %32 = vector.load %arg4[%c0_22, %c3, %c0_23, %c0_24] : memref<1x5x8x8xf32, #tpu.memory_space<vmem>>, vector<1x1x8x8xf32>
    %33 = vector.shape_cast %32 : vector<1x1x8x8xf32> to vector<8x8xf32>
    %34 = vector.shape_cast %31 : vector<8x8xf32> to vector<1x1x8x8xf32>
    tpu.vector_store %arg4[%c0_22, %c3, %c0_23, %c0_24], %34 {strides = array<i32>} : memref<1x5x8x8xf32, #tpu.memory_space<vmem>>, vector<1x1x8x8xf32>,
    %c4_i32 = arith.constant 4 : i32
    %35 = vector.broadcast %c4_i32 : i32 to vector<16x16xi32>
    %36 = arith.cmpi eq, %1, %35 : vector<16x16xi32>
    %37 = arith.extui %36 : vector<16x16xi1> to vector<16x16xi32>
    %38 = arith.sitofp %37 : vector<16x16xi32> to vector<16x16xf32>
    %cst_25 = arith.constant dense<0.000000e+00> : vector<8x16xf32>
    %39 = tpu.matmul %2, %38, %cst_25 {dimension_numbers = #tpu.dot_dimension_numbers<[1], [0], [0], [1], [0, 0, 1, 1], [], []>} : vector<8x16xf32>, vector<16x16xf32>, vector<8x16xf32> -> vector<8x16xf32>
    %cst_26 = arith.constant dense<0.000000e+00> : vector<8x8xf32>
    %40 = tpu.matmul %39, %3, %cst_26 {dimension_numbers = #tpu.dot_dimension_numbers<[1], [0], [0], [1], [0, 0, 1, 1], [], []>} : vector<8x16xf32>, vector<16x8xf32>, vector<8x8xf32> -> vector<8x8xf32>
    %c0_27 = arith.constant 0 : index
    %c4 = arith.constant 4 : index
    %c0_28 = arith.constant 0 : index
    %c0_29 = arith.constant 0 : index
    %41 = vector.load %arg4[%c0_27, %c4, %c0_28, %c0_29] : memref<1x5x8x8xf32, #tpu.memory_space<vmem>>, vector<1x1x8x8xf32>
    %42 = vector.shape_cast %41 : vector<1x1x8x8xf32> to vector<8x8xf32>
    %43 = vector.shape_cast %40 : vector<8x8xf32> to vector<1x1x8x8xf32>
    tpu.vector_store %arg4[%c0_27, %c4, %c0_28, %c0_29], %43 {strides = array<i32>} : memref<1x5x8x8xf32, #tpu.memory_space<vmem>>, vector<1x1x8x8xf32>,
    return
  }
  func.func @transform_0(%arg0: i32) -> (i32, i32, i32) {
    %c0_i32 = arith.constant 0 : i32
    %c0_i32_0 = arith.constant 0 : i32
    %c0_i32_1 = arith.constant 0 : i32
    return %arg0, %c0_i32, %c0_i32_0 : i32, i32, i32
  }
  func.func @transform_1(%arg0: i32) -> (i32, i32) {
    %c0_i32 = arith.constant 0 : i32
    %c0_i32_0 = arith.constant 0 : i32
    %c0_i32_1 = arith.constant 0 : i32
    return %c0_i32, %c0_i32_0 : i32, i32
  }
  func.func @transform_2(%arg0: i32) -> (i32, i32) {
    %c0_i32 = arith.constant 0 : i32
    %c0_i32_0 = arith.constant 0 : i32
    %c0_i32_1 = arith.constant 0 : i32
    return %c0_i32, %c0_i32_0 : i32, i32
  }
  func.func @transform_3(%arg0: i32) -> (i32, i32, i32, i32) {
    %c0_i32 = arith.constant 0 : i32
    %c0_i32_0 = arith.constant 0 : i32
    %c0_i32_1 = arith.constant 0 : i32
    %c0_i32_2 = arith.constant 0 : i32
    return %arg0, %c0_i32, %c0_i32_0, %c0_i32_1 : i32, i32, i32, i32
  }
}

</mosaic_0001>

<llo_original>
// kernel: tpu_custom_call.1
$region0: #{tpu_custom_call.1}
  #allocation0 [shape = 'u32[]', space=smem, size = 0x4, offset = 0x4, fixed_abs, tag = 'smem constant byte address 0x4 - core index']
  #allocation1 [shape = 'u32[144,128]{1,0:T(1,128)}', space=vmem, size = 0x12000, scoped, tag = 'internal scratch']
  %s0 = inlined_call_operand.hbm [shape: s32[2,16,16], index: 0, kind: input, shape index: {}]
  %s1 = inlined_call_operand.vmem [shape: f32[8,16], index: 1, kind: input, shape index: {}]
  %s2 = inlined_call_operand.vmem [shape: f32[16,8], index: 2, kind: input, shape index: {}]
  %s3 = inlined_call_operand.hbm [shape: f32[2,5,8,8], index: 3, kind: output, shape index: {}]
  %s4 = sld [smem:[#allocation0]]
  $region49: #{tpu_custom_call.1} parent=0
    _
  %s6 = ssub.s32 1, %s4
  %s7 = scalar_select 0, %s6, %s4
  $region1: #{tpu_custom_call.1} parent=0
    #allocation2 [shape = 'u8[16384]{0}', space=vmem, size = 0x4000, scoped, tag = 'input window, operand 0']
    #allocation3 [shape = 's32[2]{0}', space=sflag, size = 0x8, scoped, tag = 'scoped memory for tpu_custom_call.1']
    #allocation4 [shape = 's32[2]{0}', space=sflag, size = 0x8, scoped, tag = 'scoped memory for tpu_custom_call.1']
    #allocation5 [shape = 'u8[40960]{0}', space=vmem, size = 0xa000, scoped, tag = 'output window, operand 0']
    %8 = vsyncpa [#allocation3], 0
    %s9 = scalar_lea.sflag [#allocation3], 1
    %10 = vsyncpa %s9, 0
    %11 = vsyncpa [#allocation4], 0
    %s12 = scalar_lea.sflag [#allocation4], 1
    %13 = vsyncpa %s12, 0
    loop: start=0, step=1, limit=4
    $region2: #{tpu_custom_call.1} parent=1 // loop_pre_header
      _
    $region3: #{tpu_custom_call.1} parent=1 // loop_header
      %s15 = sphi 0, %s19
      %p16 = scmp.ge.s32.totalorder %s15, 4
      %s25 = sphi 0, %s27
      %s28 = sphi 0, %s25
      %s29 = sphi 0, %s28
      %s45 = sphi 0, %s29
      %s49 = sphi 0, %s49
      %s51 = sphi 0, %s49
      %s52 = sphi 0, %s51
      %s66 = sphi 0, %s52
      %s70 = sphi 0, %s70
      %s72 = sphi 0, %s70
      %s73 = sphi 0, %s72
      %s87 = sphi 0, %s73
      %s93 = sphi 0, %s95
      %s96 = sphi 0, %s93
      %s97 = sphi 0, %s96
      %s113 = sphi 0, %s97
    $region4: #{tpu_custom_call.1} parent=1 // loop_header_branch
      %18 = sbr.rel (%p16) target = $region8
    $region5: #{tpu_custom_call.1} parent=1 // loop_body
      %s20 = ssub.s32 %s15, 1
      %s21 = ssub.s32 %s15, 2
      %s22 = sadd.s32 %s15, 1
      %s23 = ssub.s32 %s15, %s22
      %p24 = scmp.eq.s32.totalorder %s23, 0
      %s26 = sadd.s32 %s25, 1
      %s27 = scalar_select %p24, %s25, %s26
      %p30 = pneg %p24
      %p31 = scmp.eq.s32.totalorder %s15, 1
      %p32 = por %p30, %p31
      %p33 = scmp.ne.s32.totalorder %s25, %s28
      %p34 = scmp.eq.s32.totalorder %s15, 0
      %p35 = por %p33, %p34
      %p36 = scmp.ne.s32.totalorder %s25, %s28
      %p37 = scmp.eq.s32.totalorder %s20, 1
      %p38 = por %p36, %p37
      %p39 = scmp.ne.s32.totalorder %s28, %s29
      %p40 = scmp.eq.s32.totalorder %s20, 0
      %p41 = por %p39, %p40
      %p42 = scmp.ne.s32.totalorder %s28, %s29
      %p43 = scmp.eq.s32.totalorder %s21, 1
      %p44 = por %p42, %p43
      %p46 = scmp.ne.s32.totalorder %s29, %s45
      %p47 = scmp.eq.s32.totalorder %s21, 0
      %p48 = por %p46, %p47
      %s50 = sadd.s32 %s49, 1
      %p53 = scmp.eq.s32.totalorder %s15, 1
      %p54 = scmp.ne.s32.totalorder %s49, %s51
      %p55 = scmp.eq.s32.totalorder %s15, 0
      %p56 = por %p54, %p55
      %p57 = scmp.ne.s32.totalorder %s49, %s51
      %p58 = scmp.eq.s32.totalorder %s20, 1
      %p59 = por %p57, %p58
      %p60 = scmp.ne.s32.totalorder %s51, %s52
      %p61 = scmp.eq.s32.totalorder %s20, 0
      %p62 = por %p60, %p61
      %p63 = scmp.ne.s32.totalorder %s51, %s52
      %p64 = scmp.eq.s32.totalorder %s21, 1
      %p65 = por %p63, %p64
      %p67 = scmp.ne.s32.totalorder %s52, %s66
      %p68 = scmp.eq.s32.totalorder %s21, 0
      %p69 = por %p67, %p68
      %s71 = sadd.s32 %s70, 1
      %p74 = scmp.eq.s32.totalorder %s15, 1
      %p75 = scmp.ne.s32.totalorder %s70, %s72
      %p76 = scmp.eq.s32.totalorder %s15, 0
      %p77 = por %p75, %p76
      %p78 = scmp.ne.s32.totalorder %s70, %s72
      %p79 = scmp.eq.s32.totalorder %s20, 1
      %p80 = por %p78, %p79
      %p81 = scmp.ne.s32.totalorder %s72, %s73
      %p82 = scmp.eq.s32.totalorder %s20, 0
      %p83 = por %p81, %p82
      %p84 = scmp.ne.s32.totalorder %s72, %s73
      %p85 = scmp.eq.s32.totalorder %s21, 1
      %p86 = por %p84, %p85
      %p88 = scmp.ne.s32.totalorder %s73, %s87
      %p89 = scmp.eq.s32.totalorder %s21, 0
      %p90 = por %p88, %p89
      %s91 = ssub.s32 %s15, %s22
      %p92 = scmp.eq.s32.totalorder %s91, 0
      %s94 = sadd.s32 %s93, 1
      %s95 = scalar_select %p92, %s93, %s94
      %p98 = pneg %p92
      %p99 = scmp.eq.s32.totalorder %s15, 1
      %p100 = por %p98, %p99
      %p101 = scmp.ne.s32.totalorder %s93, %s96
      %p102 = scmp.eq.s32.totalorder %s15, 0
      %p103 = por %p101, %p102
      %p104 = scmp.ne.s32.totalorder %s93, %s96
      %p105 = scmp.eq.s32.totalorder %s20, 1
      %p106 = por %p104, %p105
      %p107 = scmp.ne.s32.totalorder %s96, %s97
      %p108 = scmp.eq.s32.totalorder %s20, 0
      %p109 = por %p107, %p108
      %p110 = scmp.ne.s32.totalorder %s96, %s97
      %p111 = scmp.eq.s32.totalorder %s21, 1
      %p112 = por %p110, %p111
      %p114 = scmp.ne.s32.totalorder %s97, %s113
      %p115 = scmp.eq.s32.totalorder %s21, 0
      %p116 = por %p114, %p115
      %p117 = scmp.le.s32.totalorder 1, %s15
      %p118 = scmp.lt.s32.totalorder %s15, 3
      %p119 = pnand %p117, %p118
      %p120 = pneg %p119
      // Predicated region
      $region9: #{tpu_custom_call.1} parent=5 // pred_check
        _
      $region10: #{tpu_custom_call.1} parent=5 // pred_check_branch
        %122 = sbr.rel (%p119) target = $region12
      $region11: #{tpu_custom_call.1} parent=5 // pred_region
        %s123 = ssub.s32 %s15, 1
        // Predicated region
        $region13: #{tpu_custom_call.1} parent=11 // pred_check
          %p124 = pneg %p62
        $region14: #{tpu_custom_call.1} parent=11 // pred_check_branch
          %126 = sbr.rel (%p124) target = $region16
        $region15: #{tpu_custom_call.1} parent=11 // pred_region
          _
        $region16: #{tpu_custom_call.1} parent=11 // pred_fallthru
          _
        // Predicated region
        $region17: #{tpu_custom_call.1} parent=11 // pred_check
          %p127 = pneg %p83
        $region18: #{tpu_custom_call.1} parent=11 // pred_check_branch
          %129 = sbr.rel (%p127) target = $region20
        $region19: #{tpu_custom_call.1} parent=11 // pred_region
          _
        $region20: #{tpu_custom_call.1} parent=11 // pred_fallthru
          _
      $region12: #{tpu_custom_call.1} parent=5 // pred_fallthru
        _
      %p130 = scmp.lt.s32.totalorder %s15, 2
      // Predicated region
      $region21: #{tpu_custom_call.1} parent=5 // pred_check
        %p131 = pneg %p130
      $region22: #{tpu_custom_call.1} parent=5 // pred_check_branch
        %133 = sbr.rel (%p131) target = $region24
      $region23: #{tpu_custom_call.1} parent=5 // pred_region
        // Predicated region
        $region25: #{tpu_custom_call.1} parent=23 // pred_check
          %p134 = pneg %p35
        $region26: #{tpu_custom_call.1} parent=23 // pred_check_branch
          %136 = sbr.rel (%p134) target = $region28
        $region27: #{tpu_custom_call.1} parent=23 // pred_region
          %s137 = sand.u32 %s25, 1
          %s138 = scalar_lea.sflag [#allocation3], %s137
          %s139 = sand.u32 %s25, 1
          %s140 = smul.addr %s139, 16
          %s141 = scalar_lea.vmem [#allocation2], %s140
          %s143 = ssub.s32 256, 256
          %144 = vsyncadd %s138, %s143
          %s145 = smul.addr %s15, 2
          %s146 = smul.addr %s145, 128
          %s147 = scalar_lea.hbm %s0, %s146
          %s148 = sshll.u32 %s141, 4
          %s149 = int_to_ptr.vmem [resolvable:$true] %s148
          %154 = dma.hbm_to_vmem [thread:$0]  %s147, 256, %s149, %s138, 128, 128, 8
        $region28: #{tpu_custom_call.1} parent=23 // pred_fallthru
          _
      $region24: #{tpu_custom_call.1} parent=5 // pred_fallthru
        _
      %p155 = scmp.le.s32.totalorder 1, %s15
      %p156 = scmp.lt.s32.totalorder %s15, 3
      %p157 = pnand %p155, %p156
      %p158 = pneg %p157
      // Predicated region
      $region29: #{tpu_custom_call.1} parent=5 // pred_check
        _
      $region30: #{tpu_custom_call.1} parent=5 // pred_check_branch
        %160 = sbr.rel (%p157) target = $region32
      $region31: #{tpu_custom_call.1} parent=5 // pred_region
        %s161 = ssub.s32 %s15, 1
        %s162 = sand.u32 %s28, 1
        %s163 = scalar_lea.sflag [#allocation3], %s162
        %s164 = sand.u32 %s28, 1
        %s165 = smul.addr %s164, 16
        %s166 = scalar_lea.vmem [#allocation2], %s165
        // Predicated region
        $region33: #{tpu_custom_call.1} parent=31 // pred_check
          %p167 = pneg %p41
        $region34: #{tpu_custom_call.1} parent=31 // pred_check_branch
          %169 = sbr.rel (%p167) target = $region36
        $region35: #{tpu_custom_call.1} parent=31 // pred_region
          %170 = dma.done %s163, 256
        $region36: #{tpu_custom_call.1} parent=31 // pred_fallthru
          _
        %s171 = sand.u32 %s28, 1
        %s172 = scalar_lea.sflag [#allocation3], %s171
        %s173 = sand.u32 %s28, 1
        %s174 = smul.addr %s173, 16
        %s175 = scalar_lea.vmem [#allocation2], %s174
        %p176 = pneg %p41
        %p177 = pneg %p38
        %p178 = pneg %p62
        %p179 = pneg %p59
        %p180 = pneg %p83
        %p181 = pneg %p80
        %p182 = pneg %p109
        %p183 = pneg %p106
        %s184 = sand.u32 %s96, 1
        %s185 = scalar_lea.sflag [#allocation4], %s184
        %s186 = sand.u32 %s96, 1
        %s187 = smul.addr %s186, 40
        %s188 = scalar_lea.vmem [#allocation5], %s187
        %v189 = vld [vmem:[%s166] sm:$0xff]
        %v190 = vld [vmem:[%s166 + $0x8] sm:$0xff]
        %v191 = vld [vmem:[%s1] sm:$0xff]
        %v192 = vld [vmem:[%s2] sm:$0xff]
        %v193 = vld [vmem:[%s2 + $0x8] sm:$0xff]
        %vm194 = vcmask 64512
        %195 = vst.msk [vmem:[%s188] sm:$0xff] %vm194, 0.0
        %vm196 = vcmp.eq.s32.totalorder %v189, 1
        %vm197 = vcmp.eq.s32.totalorder %v190, 1
        %v198 = vsel %vm196, 1, 0
        %v199 = vsel %vm197, 1, 0
        %v200 = vcvt.s32.f32 %v198
        %v201 = vcvt.s32.f32 %v199
        %vm202 = vcmask 130048
        %v204 = vsel %vm202, %v191, 0
        %206 = vmatprep.subr.mxu0 0.0
        %207 = vmatpush1.msra.mxu0 %v200
        %208 = vmatprep.subr.mxu0 0.0
        %209 = vmatpush1.msra.mxu0 %v201
        %210 = vmatprep.subr.mxu0 0.0
        %211 = vmatpush1.msra.mxu0 0.0
        %212 = vmatprep.subr.mxu0 0.0
        %213 = vmatpush1.msra.mxu0 0.0
        %214 = vmatprep.subr.mxu0 0.0
        %215 = vmatpush1.msra.mxu0 0.0
        %216 = vmatprep.subr.mxu0 0.0
        %217 = vmatpush1.msra.mxu0 0.0
        %218 = vmatprep.subr.mxu0 0.0
        %219 = vmatpush1.msra.mxu0 0.0
        %220 = vmatprep.subr.mxu0 0.0
        %221 = vmatpush1.msra.mxu0 0.0
        %222 = vmatprep.subr.mxu0 0.0
        %223 = vmatpush1.msra.mxu0 0.0
        %224 = vmatprep.subr.mxu0 0.0
        %225 = vmatpush1.msra.mxu0 0.0
        %226 = vmatprep.subr.mxu0 0.0
        %227 = vmatpush1.msra.mxu0 0.0
        %228 = vmatprep.subr.mxu0 0.0
        %229 = vmatpush1.msra.mxu0 0.0
        %230 = vmatprep.subr.mxu0 0.0
        %231 = vmatpush1.msra.mxu0 0.0
        %232 = vmatprep.subr.mxu0 0.0
        %233 = vmatpush1.msra.mxu0 0.0
        %234 = vmatprep.subr.mxu0 0.0
        %235 = vmatpush1.msra.mxu0 0.0
        %236 = vmatprep.subr.mxu0 0.0
        %237 = vmatpush1.msra.mxu0 0.0
        %238 = vmatprep.subr.mxu0 0.0
        %239 = vmatpush1.msra.mxu0 0.0
        %240 = vmatprep.subr.mxu0 0.0
        %241 = vmatpush1.msra.mxu0 0.0
        %242 = vmatprep.subr.mxu0 0.0
        %243 = vmatpush1.msra.mxu0 0.0
        %244 = vmatprep.subr.mxu0 0.0
        %245 = vmatpush1.msra.mxu0 0.0
        %246 = vmatprep.subr.mxu0 0.0
        %247 = vmatpush1.msra.mxu0 0.0
        %248 = vmatprep.subr.mxu0 0.0
        %249 = vmatpush1.msra.mxu0 0.0
        %250 = vmatprep.subr.mxu0 0.0
        %251 = vmatpush1.msra.mxu0 0.0
        %252 = vmatprep.subr.mxu0 0.0
        %253 = vmatpush1.msra.mxu0 0.0
        %254 = vmatprep.subr.mxu0 0.0
        %255 = vmatpush1.msra.mxu0 0.0
        %256 = vmatprep.subr.mxu0 0.0
        %257 = vmatpush1.msra.mxu0 0.0
        %258 = vmatprep.subr.mxu0 0.0
        %259 = vmatpush1.msra.mxu0 0.0
        %260 = vmatprep.subr.mxu0 0.0
        %261 = vmatpush1.msra.mxu0 0.0
        %262 = vmatprep.subr.mxu0 0.0
        %263 = vmatpush1.msra.mxu0 0.0
        %264 = vmatprep.subr.mxu0 0.0
        %265 = vmatpush1.msra.mxu0 0.0
        %266 = vmatprep.subr.mxu0 0.0
        %267 = vmatpush1.msra.mxu0 0.0
        %268 = vmatprep.subr.mxu0 0.0
        %269 = vmatpush1.msra.mxu0 0.0
        %270 = vmatprep.mubr.f32.mxu0 0.0
        %271 = vmatmul.mubr.f32.gmra.mrb[0].mxu0 %v204
        %v272 = vpop.f32.mrb[0].mxu0
        %v273 = vadd.f32 0.0, %v272
        %v274 = vpop.f32.mrb[0].mxu0
        %275 = vdwg.mxu0
        %v277 = vsel %vm202, %v273, 0
        %279 = vmatprep.subr.mxu0 0.0
        %280 = vmatpush1.msra.mxu0 %v192
        %281 = vmatprep.subr.mxu0 0.0
        %282 = vmatpush1.msra.mxu0 %v193
        %283 = vmatprep.subr.mxu0 0.0
        %284 = vmatpush1.msra.mxu0 0.0
        %285 = vmatprep.subr.mxu0 0.0
        %286 = vmatpush1.msra.mxu0 0.0
        %287 = vmatprep.subr.mxu0 0.0
        %288 = vmatpush1.msra.mxu0 0.0
        %289 = vmatprep.subr.mxu0 0.0
        %290 = vmatpush1.msra.mxu0 0.0
        %291 = vmatprep.subr.mxu0 0.0
        %292 = vmatpush1.msra.mxu0 0.0
        %293 = vmatprep.subr.mxu0 0.0
        %294 = vmatpush1.msra.mxu0 0.0
        %295 = vmatprep.subr.mxu0 0.0
        %296 = vmatpush1.msra.mxu0 0.0
        %297 = vmatprep.subr.mxu0 0.0
        %298 = vmatpush1.msra.mxu0 0.0
        %299 = vmatprep.subr.mxu0 0.0
        %300 = vmatpush1.msra.mxu0 0.0
        %301 = vmatprep.subr.mxu0 0.0
        %302 = vmatpush1.msra.mxu0 0.0
        %303 = vmatprep.subr.mxu0 0.0
        %304 = vmatpush1.msra.mxu0 0.0
        %305 = vmatprep.subr.mxu0 0.0
        %306 = vmatpush1.msra.mxu0 0.0
        %307 = vmatprep.subr.mxu0 0.0
        %308 = vmatpush1.msra.mxu0 0.0
        %309 = vmatprep.subr.mxu0 0.0
        %310 = vmatpush1.msra.mxu0 0.0
        %311 = vmatprep.subr.mxu0 0.0
        %312 = vmatpush1.msra.mxu0 0.0
        %313 = vmatprep.subr.mxu0 0.0
        %314 = vmatpush1.msra.mxu0 0.0
        %315 = vmatprep.subr.mxu0 0.0
        %316 = vmatpush1.msra.mxu0 0.0
        %317 = vmatprep.subr.mxu0 0.0
        %318 = vmatpush1.msra.mxu0 0.0
        %319 = vmatprep.subr.mxu0 0.0
        %320 = vmatpush1.msra.mxu0 0.0
        %321 = vmatprep.subr.mxu0 0.0
        %322 = vmatpush1.msra.mxu0 0.0
        %323 = vmatprep.subr.mxu0 0.0
        %324 = vmatpush1.msra.mxu0 0.0
        %325 = vmatprep.subr.mxu0 0.0
        %326 = vmatpush1.msra.mxu0 0.0
        %327 = vmatprep.subr.mxu0 0.0
        %328 = vmatpush1.msra.mxu0 0.0
        %329 = vmatprep.subr.mxu0 0.0
        %330 = vmatpush1.msra.mxu0 0.0
        %331 = vmatprep.subr.mxu0 0.0
        %332 = vmatpush1.msra.mxu0 0.0
        %333 = vmatprep.subr.mxu0 0.0
        %334 = vmatpush1.msra.mxu0 0.0
        %335 = vmatprep.subr.mxu0 0.0
        %336 = vmatpush1.msra.mxu0 0.0
        %337 = vmatprep.subr.mxu0 0.0
        %338 = vmatpush1.msra.mxu0 0.0
        %339 = vmatprep.subr.mxu0 0.0
        %340 = vmatpush1.msra.mxu0 0.0
        %341 = vmatprep.subr.mxu0 0.0
        %342 = vmatpush1.msra.mxu0 0.0
        %343 = vmatprep.mubr.f32.mxu0 0.0
        %344 = vmatmul.mubr.f32.gmra.mrb[0].mxu0 %v277
        %v345 = vpop.f32.mrb[0].mxu0
        %v346 = vadd.f32 0.0, %v345
        %v347 = vpop.f32.mrb[0].mxu0
        %348 = vdwg.mxu0
        %s349 = scalar_lea.vmem %s188, 8 [#allocation5]
        %350 = vst.msk [vmem:[%s349] sm:$0xff] %vm194, %v346
        %vm351 = vcmp.eq.s32.totalorder %v189, 2
        %vm352 = vcmp.eq.s32.totalorder %v190, 2
        %v353 = vsel %vm351, 1, 0
        %v354 = vsel %vm352, 1, 0
        %v355 = vcvt.s32.f32 %v353
        %v356 = vcvt.s32.f32 %v354
        %357 = vmatprep.subr.mxu0 0.0
        %358 = vmatpush1.msra.mxu0 %v355
        %359 = vmatprep.subr.mxu0 0.0
        %360 = vmatpush1.msra.mxu0 %v356
        %361 = vmatprep.subr.mxu0 0.0
        %362 = vmatpush1.msra.mxu0 0.0
        %363 = vmatprep.subr.mxu0 0.0
        %364 = vmatpush1.msra.mxu0 0.0
        %365 = vmatprep.subr.mxu0 0.0
        %366 = vmatpush1.msra.mxu0 0.0
        %367 = vmatprep.subr.mxu0 0.0
        %368 = vmatpush1.msra.mxu0 0.0
        %369 = vmatprep.subr.mxu0 0.0
        %370 = vmatpush1.msra.mxu0 0.0
        %371 = vmatprep.subr.mxu0 0.0
        %372 = vmatpush1.msra.mxu0 0.0
        %373 = vmatprep.subr.mxu0 0.0
        %374 = vmatpush1.msra.mxu0 0.0
        %375 = vmatprep.subr.mxu0 0.0
        %376 = vmatpush1.msra.mxu0 0.0
        %377 = vmatprep.subr.mxu0 0.0
        %378 = vmatpush1.msra.mxu0 0.0
        %379 = vmatprep.subr.mxu0 0.0
        %380 = vmatpush1.msra.mxu0 0.0
        %381 = vmatprep.subr.mxu0 0.0
        %382 = vmatpush1.msra.mxu0 0.0
        %383 = vmatprep.subr.mxu0 0.0
        %384 = vmatpush1.msra.mxu0 0.0
        %385 = vmatprep.subr.mxu0 0.0
        %386 = vmatpush1.msra.mxu0 0.0
        %387 = vmatprep.subr.mxu0 0.0
        %388 = vmatpush1.msra.mxu0 0.0
        %389 = vmatprep.subr.mxu0 0.0
        %390 = vmatpush1.msra.mxu0 0.0
        %391 = vmatprep.subr.mxu0 0.0
        %392 = vmatpush1.msra.mxu0 0.0
        %393 = vmatprep.subr.mxu0 0.0
        %394 = vmatpush1.msra.mxu0 0.0
        %395 = vmatprep.subr.mxu0 0.0
        %396 = vmatpush1.msra.mxu0 0.0
        %397 = vmatprep.subr.mxu0 0.0
        %398 = vmatpush1.msra.mxu0 0.0
        %399 = vmatprep.subr.mxu0 0.0
        %400 = vmatpush1.msra.mxu0 0.0
        %401 = vmatprep.subr.mxu0 0.0
        %402 = vmatpush1.msra.mxu0 0.0
        %403 = vmatprep.subr.mxu0 0.0
        %404 = vmatpush1.msra.mxu0 0.0
        %405 = vmatprep.subr.mxu0 0.0
        %406 = vmatpush1.msra.mxu0 0.0
        %407 = vmatprep.subr.mxu0 0.0
        %408 = vmatpush1.msra.mxu0 0.0
        %409 = vmatprep.subr.mxu0 0.0
        %410 = vmatpush1.msra.mxu0 0.0
        %411 = vmatprep.subr.mxu0 0.0
        %412 = vmatpush1.msra.mxu0 0.0
        %413 = vmatprep.subr.mxu0 0.0
        %414 = vmatpush1.msra.mxu0 0.0
        %415 = vmatprep.subr.mxu0 0.0
        %416 = vmatpush1.msra.mxu0 0.0
        %417 = vmatprep.subr.mxu0 0.0
        %418 = vmatpush1.msra.mxu0 0.0
        %419 = vmatprep.subr.mxu0 0.0
        %420 = vmatpush1.msra.mxu0 0.0
        %421 = vmatprep.mubr.f32.mxu0 0.0
        %422 = vmatmul.mubr.f32.gmra.mrb[0].mxu0 %v204
        %v423 = vpop.f32.mrb[0].mxu0
        %v424 = vadd.f32 0.0, %v423
        %v425 = vpop.f32.mrb[0].mxu0
        %426 = vdwg.mxu0
        %v428 = vsel %vm202, %v424, 0
        %430 = vmatprep.subr.mxu0 0.0
        %431 = vmatpush1.msra.mxu0 %v192
        %432 = vmatprep.subr.mxu0 0.0
        %433 = vmatpush1.msra.mxu0 %v193
        %434 = vmatprep.subr.mxu0 0.0
        %435 = vmatpush1.msra.mxu0 0.0
        %436 = vmatprep.subr.mxu0 0.0
        %437 = vmatpush1.msra.mxu0 0.0
        %438 = vmatprep.subr.mxu0 0.0
        %439 = vmatpush1.msra.mxu0 0.0
        %440 = vmatprep.subr.mxu0 0.0
        %441 = vmatpush1.msra.mxu0 0.0
        %442 = vmatprep.subr.mxu0 0.0
        %443 = vmatpush1.msra.mxu0 0.0
        %444 = vmatprep.subr.mxu0 0.0
        %445 = vmatpush1.msra.mxu0 0.0
        %446 = vmatprep.subr.mxu0 0.0
        %447 = vmatpush1.msra.mxu0 0.0
        %448 = vmatprep.subr.mxu0 0.0
        %449 = vmatpush1.msra.mxu0 0.0
        %450 = vmatprep.subr.mxu0 0.0
        %451 = vmatpush1.msra.mxu0 0.0
        %452 = vmatprep.subr.mxu0 0.0
        %453 = vmatpush1.msra.mxu0 0.0
        %454 = vmatprep.subr.mxu0 0.0
        %455 = vmatpush1.msra.mxu0 0.0
        %456 = vmatprep.subr.mxu0 0.0
        %457 = vmatpush1.msra.mxu0 0.0
        %458 = vmatprep.subr.mxu0 0.0
        %459 = vmatpush1.msra.mxu0 0.0
        %460 = vmatprep.subr.mxu0 0.0
        %461 = vmatpush1.msra.mxu0 0.0
        %462 = vmatprep.subr.mxu0 0.0
        %463 = vmatpush1.msra.mxu0 0.0
        %464 = vmatprep.subr.mxu0 0.0
        %465 = vmatpush1.msra.mxu0 0.0
        %466 = vmatprep.subr.mxu0 0.0
        %467 = vmatpush1.msra.mxu0 0.0
        %468 = vmatprep.subr.mxu0 0.0
        %469 = vmatpush1.msra.mxu0 0.0
        %470 = vmatprep.subr.mxu0 0.0
        %471 = vmatpush1.msra.mxu0 0.0
        %472 = vmatprep.subr.mxu0 0.0
        %473 = vmatpush1.msra.mxu0 0.0
        %474 = vmatprep.subr.mxu0 0.0
        %475 = vmatpush1.msra.mxu0 0.0
        %476 = vmatprep.subr.mxu0 0.0
        %477 = vmatpush1.msra.mxu0 0.0
        %478 = vmatprep.subr.mxu0 0.0
        %479 = vmatpush1.msra.mxu0 0.0
        %480 = vmatprep.subr.mxu0 0.0
        %481 = vmatpush1.msra.mxu0 0.0
        %482 = vmatprep.subr.mxu0 0.0
        %483 = vmatpush1.msra.mxu0 0.0
        %484 = vmatprep.subr.mxu0 0.0
        %485 = vmatpush1.msra.mxu0 0.0
        %486 = vmatprep.subr.mxu0 0.0
        %487 = vmatpush1.msra.mxu0 0.0
        %488 = vmatprep.subr.mxu0 0.0
        %489 = vmatpush1.msra.mxu0 0.0
        %490 = vmatprep.subr.mxu0 0.0
        %491 = vmatpush1.msra.mxu0 0.0
        %492 = vmatprep.subr.mxu0 0.0
        %493 = vmatpush1.msra.mxu0 0.0
        %494 = vmatprep.mubr.f32.mxu0 0.0
        %495 = vmatmul.mubr.f32.gmra.mrb[0].mxu0 %v428
        %v496 = vpop.f32.mrb[0].mxu0
        %v497 = vadd.f32 0.0, %v496
        %v498 = vpop.f32.mrb[0].mxu0
        %499 = vdwg.mxu0
        %s500 = scalar_lea.vmem %s188, 16 [#allocation5]
        %501 = vst.msk [vmem:[%s500] sm:$0xff] %vm194, %v497
        %vm502 = vcmp.eq.s32.totalorder %v189, 3
        %vm503 = vcmp.eq.s32.totalorder %v190, 3
        %v504 = vsel %vm502, 1, 0
        %v505 = vsel %vm503, 1, 0
        %v506 = vcvt.s32.f32 %v504
        %v507 = vcvt.s32.f32 %v505
        %508 = vmatprep.subr.mxu0 0.0
        %509 = vmatpush1.msra.mxu0 %v506
        %510 = vmatprep.subr.mxu0 0.0
        %511 = vmatpush1.msra.mxu0 %v507
        %512 = vmatprep.subr.mxu0 0.0
        %513 = vmatpush1.msra.mxu0 0.0
        %514 = vmatprep.subr.mxu0 0.0
        %515 = vmatpush1.msra.mxu0 0.0
        %516 = vmatprep.subr.mxu0 0.0
        %517 = vmatpush1.msra.mxu0 0.0
        %518 = vmatprep.subr.mxu0 0.0
        %519 = vmatpush1.msra.mxu0 0.0
        %520 = vmatprep.subr.mxu0 0.0
        %521 = vmatpush1.msra.mxu0 0.0
        %522 = vmatprep.subr.mxu0 0.0
        %523 = vmatpush1.msra.mxu0 0.0
        %524 = vmatprep.subr.mxu0 0.0
        %525 = vmatpush1.msra.mxu0 0.0
        %526 = vmatprep.subr.mxu0 0.0
        %527 = vmatpush1.msra.mxu0 0.0
        %528 = vmatprep.subr.mxu0 0.0
        %529 = vmatpush1.msra.mxu0 0.0
        %530 = vmatprep.subr.mxu0 0.0
        %531 = vmatpush1.msra.mxu0 0.0
        %532 = vmatprep.subr.mxu0 0.0
        %533 = vmatpush1.msra.mxu0 0.0
        %534 = vmatprep.subr.mxu0 0.0
        %535 = vmatpush1.msra.mxu0 0.0
        %536 = vmatprep.subr.mxu0 0.0
        %537 = vmatpush1.msra.mxu0 0.0
        %538 = vmatprep.subr.mxu0 0.0
        %539 = vmatpush1.msra.mxu0 0.0
        %540 = vmatprep.subr.mxu0 0.0
        %541 = vmatpush1.msra.mxu0 0.0
        %542 = vmatprep.subr.mxu0 0.0
        %543 = vmatpush1.msra.mxu0 0.0
        %544 = vmatprep.subr.mxu0 0.0
        %545 = vmatpush1.msra.mxu0 0.0
        %546 = vmatprep.subr.mxu0 0.0
        %547 = vmatpush1.msra.mxu0 0.0
        %548 = vmatprep.subr.mxu0 0.0
        %549 = vmatpush1.msra.mxu0 0.0
        %550 = vmatprep.subr.mxu0 0.0
        %551 = vmatpush1.msra.mxu0 0.0
        %552 = vmatprep.subr.mxu0 0.0
        %553 = vmatpush1.msra.mxu0 0.0
        %554 = vmatprep.subr.mxu0 0.0
        %555 = vmatpush1.msra.mxu0 0.0
        %556 = vmatprep.subr.mxu0 0.0
        %557 = vmatpush1.msra.mxu0 0.0
        %558 = vmatprep.subr.mxu0 0.0
        %559 = vmatpush1.msra.mxu0 0.0
        %560 = vmatprep.subr.mxu0 0.0
        %561 = vmatpush1.msra.mxu0 0.0
        %562 = vmatprep.subr.mxu0 0.0
        %563 = vmatpush1.msra.mxu0 0.0
        %564 = vmatprep.subr.mxu0 0.0
        %565 = vmatpush1.msra.mxu0 0.0
        %566 = vmatprep.subr.mxu0 0.0
        %567 = vmatpush1.msra.mxu0 0.0
        %568 = vmatprep.subr.mxu0 0.0
        %569 = vmatpush1.msra.mxu0 0.0
        %570 = vmatprep.subr.mxu0 0.0
        %571 = vmatpush1.msra.mxu0 0.0
        %572 = vmatprep.mubr.f32.mxu0 0.0
        %573 = vmatmul.mubr.f32.gmra.mrb[0].mxu0 %v204
        %v574 = vpop.f32.mrb[0].mxu0
        %v575 = vadd.f32 0.0, %v574
        %v576 = vpop.f32.mrb[0].mxu0
        %577 = vdwg.mxu0
        %v579 = vsel %vm202, %v575, 0
        %581 = vmatprep.subr.mxu0 0.0
        %582 = vmatpush1.msra.mxu0 %v192
        %583 = vmatprep.subr.mxu0 0.0
        %584 = vmatpush1.msra.mxu0 %v193
        %585 = vmatprep.subr.mxu0 0.0
        %586 = vmatpush1.msra.mxu0 0.0
        %587 = vmatprep.subr.mxu0 0.0
        %588 = vmatpush1.msra.mxu0 0.0
        %589 = vmatprep.subr.mxu0 0.0
        %590 = vmatpush1.msra.mxu0 0.0
        %591 = vmatprep.subr.mxu0 0.0
        %592 = vmatpush1.msra.mxu0 0.0
        %593 = vmatprep.subr.mxu0 0.0
        %594 = vmatpush1.msra.mxu0 0.0
        %595 = vmatprep.subr.mxu0 0.0
        %596 = vmatpush1.msra.mxu0 0.0
        %597 = vmatprep.subr.mxu0 0.0
        %598 = vmatpush1.msra.mxu0 0.0
        %599 = vmatprep.subr.mxu0 0.0
        %600 = vmatpush1.msra.mxu0 0.0
        %601 = vmatprep.subr.mxu0 0.0
        %602 = vmatpush1.msra.mxu0 0.0
        %603 = vmatprep.subr.mxu0 0.0
        %604 = vmatpush1.msra.mxu0 0.0
        %605 = vmatprep.subr.mxu0 0.0
        %606 = vmatpush1.msra.mxu0 0.0
        %607 = vmatprep.subr.mxu0 0.0
        %608 = vmatpush1.msra.mxu0 0.0
        %609 = vmatprep.subr.mxu0 0.0
        %610 = vmatpush1.msra.mxu0 0.0
        %611 = vmatprep.subr.mxu0 0.0
        %612 = vmatpush1.msra.mxu0 0.0
        %613 = vmatprep.subr.mxu0 0.0
        %614 = vmatpush1.msra.mxu0 0.0
        %615 = vmatprep.subr.mxu0 0.0
        %616 = vmatpush1.msra.mxu0 0.0
        %617 = vmatprep.subr.mxu0 0.0
        %618 = vmatpush1.msra.mxu0 0.0
        %619 = vmatprep.subr.mxu0 0.0
        %620 = vmatpush1.msra.mxu0 0.0
        %621 = vmatprep.subr.mxu0 0.0
        %622 = vmatpush1.msra.mxu0 0.0
        %623 = vmatprep.subr.mxu0 0.0
        %624 = vmatpush1.msra.mxu0 0.0
        %625 = vmatprep.subr.mxu0 0.0
        %626 = vmatpush1.msra.mxu0 0.0
        %627 = vmatprep.subr.mxu0 0.0
        %628 = vmatpush1.msra.mxu0 0.0
        %629 = vmatprep.subr.mxu0 0.0
        %630 = vmatpush1.msra.mxu0 0.0
        %631 = vmatprep.subr.mxu0 0.0
        %632 = vmatpush1.msra.mxu0 0.0
        %633 = vmatprep.subr.mxu0 0.0
        %634 = vmatpush1.msra.mxu0 0.0
        %635 = vmatprep.subr.mxu0 0.0
        %636 = vmatpush1.msra.mxu0 0.0
        %637 = vmatprep.subr.mxu0 0.0
        %638 = vmatpush1.msra.mxu0 0.0
        %639 = vmatprep.subr.mxu0 0.0
        %640 = vmatpush1.msra.mxu0 0.0
        %641 = vmatprep.subr.mxu0 0.0
        %642 = vmatpush1.msra.mxu0 0.0
        %643 = vmatprep.subr.mxu0 0.0
        %644 = vmatpush1.msra.mxu0 0.0
        %645 = vmatprep.mubr.f32.mxu0 0.0
        %646 = vmatmul.mubr.f32.gmra.mrb[0].mxu0 %v579
        %v647 = vpop.f32.mrb[0].mxu0
        %v648 = vadd.f32 0.0, %v647
        %v649 = vpop.f32.mrb[0].mxu0
        %650 = vdwg.mxu0
        %s651 = scalar_lea.vmem %s188, 24 [#allocation5]
        %652 = vst.msk [vmem:[%s651] sm:$0xff] %vm194, %v648
        %vm653 = vcmp.eq.s32.totalorder %v189, 4
        %vm654 = vcmp.eq.s32.totalorder %v190, 4
        %v655 = vsel %vm653, 1, 0
        %v656 = vsel %vm654, 1, 0
        %v657 = vcvt.s32.f32 %v655
        %v658 = vcvt.s32.f32 %v656
        %659 = vmatprep.subr.mxu0 0.0
        %660 = vmatpush1.msra.mxu0 %v657
        %661 = vmatprep.subr.mxu0 0.0
        %662 = vmatpush1.msra.mxu0 %v658
        %663 = vmatprep.subr.mxu0 0.0
        %664 = vmatpush1.msra.mxu0 0.0
        %665 = vmatprep.subr.mxu0 0.0
        %666 = vmatpush1.msra.mxu0 0.0
        %667 = vmatprep.subr.mxu0 0.0
        %668 = vmatpush1.msra.mxu0 0.0
        %669 = vmatprep.subr.mxu0 0.0
        %670 = vmatpush1.msra.mxu0 0.0
        %671 = vmatprep.subr.mxu0 0.0
        %672 = vmatpush1.msra.mxu0 0.0
        %673 = vmatprep.subr.mxu0 0.0
        %674 = vmatpush1.msra.mxu0 0.0
        %675 = vmatprep.subr.mxu0 0.0
        %676 = vmatpush1.msra.mxu0 0.0
        %677 = vmatprep.subr.mxu0 0.0
        %678 = vmatpush1.msra.mxu0 0.0
        %679 = vmatprep.subr.mxu0 0.0
        %680 = vmatpush1.msra.mxu0 0.0
        %681 = vmatprep.subr.mxu0 0.0
        %682 = vmatpush1.msra.mxu0 0.0
        %683 = vmatprep.subr.mxu0 0.0
        %684 = vmatpush1.msra.mxu0 0.0
        %685 = vmatprep.subr.mxu0 0.0
        %686 = vmatpush1.msra.mxu0 0.0
        %687 = vmatprep.subr.mxu0 0.0
        %688 = vmatpush1.msra.mxu0 0.0
        %689 = vmatprep.subr.mxu0 0.0
        %690 = vmatpush1.msra.mxu0 0.0
        %691 = vmatprep.subr.mxu0 0.0
        %692 = vmatpush1.msra.mxu0 0.0
        %693 = vmatprep.subr.mxu0 0.0
        %694 = vmatpush1.msra.mxu0 0.0
        %695 = vmatprep.subr.mxu0 0.0
        %696 = vmatpush1.msra.mxu0 0.0
        %697 = vmatprep.subr.mxu0 0.0
        %698 = vmatpush1.msra.mxu0 0.0
        %699 = vmatprep.subr.mxu0 0.0
        %700 = vmatpush1.msra.mxu0 0.0
        %701 = vmatprep.subr.mxu0 0.0
        %702 = vmatpush1.msra.mxu0 0.0
        %703 = vmatprep.subr.mxu0 0.0
        %704 = vmatpush1.msra.mxu0 0.0
        %705 = vmatprep.subr.mxu0 0.0
        %706 = vmatpush1.msra.mxu0 0.0
        %707 = vmatprep.subr.mxu0 0.0
        %708 = vmatpush1.msra.mxu0 0.0
        %709 = vmatprep.subr.mxu0 0.0
        %710 = vmatpush1.msra.mxu0 0.0
        %711 = vmatprep.subr.mxu0 0.0
        %712 = vmatpush1.msra.mxu0 0.0
        %713 = vmatprep.subr.mxu0 0.0
        %714 = vmatpush1.msra.mxu0 0.0
        %715 = vmatprep.subr.mxu0 0.0
        %716 = vmatpush1.msra.mxu0 0.0
        %717 = vmatprep.subr.mxu0 0.0
        %718 = vmatpush1.msra.mxu0 0.0
        %719 = vmatprep.subr.mxu0 0.0
        %720 = vmatpush1.msra.mxu0 0.0
        %721 = vmatprep.subr.mxu0 0.0
        %722 = vmatpush1.msra.mxu0 0.0
        %723 = vmatprep.mubr.f32.mxu0 0.0
        %724 = vmatmul.mubr.f32.gmra.mrb[0].mxu0 %v204
        %v725 = vpop.f32.mrb[0].mxu0
        %v726 = vadd.f32 0.0, %v725
        %v727 = vpop.f32.mrb[0].mxu0
        %728 = vdwg.mxu0
        %v730 = vsel %vm202, %v726, 0
        %732 = vmatprep.subr.mxu0 0.0
        %733 = vmatpush1.msra.mxu0 %v192
        %734 = vmatprep.subr.mxu0 0.0
        %735 = vmatpush1.msra.mxu0 %v193
        %736 = vmatprep.subr.mxu0 0.0
        %737 = vmatpush1.msra.mxu0 0.0
        %738 = vmatprep.subr.mxu0 0.0
        %739 = vmatpush1.msra.mxu0 0.0
        %740 = vmatprep.subr.mxu0 0.0
        %741 = vmatpush1.msra.mxu0 0.0
        %742 = vmatprep.subr.mxu0 0.0
        %743 = vmatpush1.msra.mxu0 0.0
        %744 = vmatprep.subr.mxu0 0.0
        %745 = vmatpush1.msra.mxu0 0.0
        %746 = vmatprep.subr.mxu0 0.0
        %747 = vmatpush1.msra.mxu0 0.0
        %748 = vmatprep.subr.mxu0 0.0
        %749 = vmatpush1.msra.mxu0 0.0
        %750 = vmatprep.subr.mxu0 0.0
        %751 = vmatpush1.msra.mxu0 0.0
        %752 = vmatprep.subr.mxu0 0.0
        %753 = vmatpush1.msra.mxu0 0.0
        %754 = vmatprep.subr.mxu0 0.0
        %755 = vmatpush1.msra.mxu0 0.0
        %756 = vmatprep.subr.mxu0 0.0
        %757 = vmatpush1.msra.mxu0 0.0
        %758 = vmatprep.subr.mxu0 0.0
        %759 = vmatpush1.msra.mxu0 0.0
        %760 = vmatprep.subr.mxu0 0.0
        %761 = vmatpush1.msra.mxu0 0.0
        %762 = vmatprep.subr.mxu0 0.0
        %763 = vmatpush1.msra.mxu0 0.0
        %764 = vmatprep.subr.mxu0 0.0
        %765 = vmatpush1.msra.mxu0 0.0
        %766 = vmatprep.subr.mxu0 0.0
        %767 = vmatpush1.msra.mxu0 0.0
        %768 = vmatprep.subr.mxu0 0.0
        %769 = vmatpush1.msra.mxu0 0.0
        %770 = vmatprep.subr.mxu0 0.0
        %771 = vmatpush1.msra.mxu0 0.0
        %772 = vmatprep.subr.mxu0 0.0
        %773 = vmatpush1.msra.mxu0 0.0
        %774 = vmatprep.subr.mxu0 0.0
        %775 = vmatpush1.msra.mxu0 0.0
        %776 = vmatprep.subr.mxu0 0.0
        %777 = vmatpush1.msra.mxu0 0.0
        %778 = vmatprep.subr.mxu0 0.0
        %779 = vmatpush1.msra.mxu0 0.0
        %780 = vmatprep.subr.mxu0 0.0
        %781 = vmatpush1.msra.mxu0 0.0
        %782 = vmatprep.subr.mxu0 0.0
        %783 = vmatpush1.msra.mxu0 0.0
        %784 = vmatprep.subr.mxu0 0.0
        %785 = vmatpush1.msra.mxu0 0.0
        %786 = vmatprep.subr.mxu0 0.0
        %787 = vmatpush1.msra.mxu0 0.0
        %788 = vmatprep.subr.mxu0 0.0
        %789 = vmatpush1.msra.mxu0 0.0
        %790 = vmatprep.subr.mxu0 0.0
        %791 = vmatpush1.msra.mxu0 0.0
        %792 = vmatprep.subr.mxu0 0.0
        %793 = vmatpush1.msra.mxu0 0.0
        %794 = vmatprep.subr.mxu0 0.0
        %795 = vmatpush1.msra.mxu0 0.0
        %796 = vmatprep.mubr.f32.mxu0 0.0
        %797 = vmatmul.mubr.f32.gmra.mrb[0].mxu0 %v730
        %v798 = vpop.f32.mrb[0].mxu0
        %v799 = vadd.f32 0.0, %v798
        %v800 = vpop.f32.mrb[0].mxu0
        %801 = vdwg.mxu0
        %s802 = scalar_lea.vmem %s188, 32 [#allocation5]
        %803 = vst.msk [vmem:[%s802] sm:$0xff] %vm194, %v799
        %s804 = sand.u32 %s96, 1
        %s805 = scalar_lea.sflag [#allocation4], %s804
        %s806 = sand.u32 %s96, 1
        %s807 = smul.addr %s806, 40
        %s808 = scalar_lea.vmem [#allocation5], %s807
        // Predicated region
        $region37: #{tpu_custom_call.1} parent=31 // pred_check
          %p809 = pneg %p106
        $region38: #{tpu_custom_call.1} parent=31 // pred_check_branch
          %811 = sbr.rel (%p809) target = $region40
        $region39: #{tpu_custom_call.1} parent=31 // pred_region
          %s813 = ssub.s32 640, 640
          %814 = vsyncadd %s805, %s813
          %s815 = smul.addr %s20, 5
          %s816 = smul.addr %s815, 128
          %s817 = scalar_lea.hbm %s3, %s816
          %s818 = sshll.u32 %s808, 4
          %s819 = int_to_ptr.vmem [resolvable:$true] %s818
          %824 = dma.vmem_to_hbm [thread:$0]  %s819, 640, %s817, %s805, 128, 128, 8
        $region40: #{tpu_custom_call.1} parent=31 // pred_fallthru
          _
      $region32: #{tpu_custom_call.1} parent=5 // pred_fallthru
        _
      %p825 = scmp.le.s32.totalorder 2, %s15
      // Predicated region
      $region41: #{tpu_custom_call.1} parent=5 // pred_check
        %p826 = pneg %p825
      $region42: #{tpu_custom_call.1} parent=5 // pred_check_branch
        %828 = sbr.rel (%p826) target = $region44
      $region43: #{tpu_custom_call.1} parent=5 // pred_region
        %s829 = ssub.s32 %s15, 2
        // Predicated region
        $region45: #{tpu_custom_call.1} parent=43 // pred_check
          %p830 = pneg %p112
        $region46: #{tpu_custom_call.1} parent=43 // pred_check_branch
          %832 = sbr.rel (%p830) target = $region48
        $region47: #{tpu_custom_call.1} parent=43 // pred_region
          %s833 = sand.u32 %s97, 1
          %s834 = scalar_lea.sflag [#allocation4], %s833
          %s835 = sand.u32 %s97, 1
          %s836 = smul.addr %s835, 40
          %s837 = scalar_lea.vmem [#allocation5], %s836
          %838 = dma.done %s834, 640
        $region48: #{tpu_custom_call.1} parent=43 // pred_fallthru
          _
      $region44: #{tpu_custom_call.1} parent=5 // pred_fallthru
        _
    $region6: #{tpu_custom_call.1} parent=1 // loop_footer
      %s19 = sadd.s32 1, %s15
    $region7: #{tpu_custom_call.1} parent=1 // loop_footer_branch
      %14 = sbr.rel target = $region3
    $region8: #{tpu_custom_call.1} parent=1 // loop_exit
      _
    %839 = vsyncpa [#allocation3], 1
    %s840 = scalar_lea.sflag [#allocation3], 1
    %841 = vsyncpa %s840, 1
    %842 = vsyncpa [#allocation4], 1
    %s843 = scalar_lea.sflag [#allocation4], 1
    %844 = vsyncpa %s843, 1

</llo_original>
